<compile_context>
chip_gen: v5e
topology: v5e:2x2
jax: 0.10.0
libtpu: 0.0.40
codegen_flags: <defaults>
</compile_context>

<pallas_src>
import functools

import jax
import jax.numpy as jnp
from jax import lax
from jax.experimental import pallas as pl
from jax.experimental.pallas import tpu as pltpu


_VMEM_LIMIT_BYTES = 48 * 1024 * 1024   # explicit: > v5e 16 MiB default, < v7x 64 MiB physical
_WORKING_SET_CAP = 24 << 20            # double-buffered in+out tile budget (bytes)
_MIN_TILE_BYTES = 1 << 20              # >= ~1 MiB streamed input per grid step


# ---------------------------------------------------------------------------
# Pass 1: input statistics.  The 1x1 conv is linear, so the batch statistics
# of the conv output follow exactly from
#     sum_x = sum_m x[:, m]               (Cin,)
#     G     = sum_m x[:, m] x[:, m]^T     (Cin, Cin)
# and y never has to be materialized just for the stats.  Partials are kept
# per batch image (outer "parallel" grid axis -> sharded across TensorCores
# on v7x) and summed in the wrapper.
# ---------------------------------------------------------------------------
def _stats_kernel(x_ref, gram_ref, xsum_ref, *, hw, tm):
    i = pl.program_id(1)

    @pl.when(i == 0)
    def _():
        gram_ref[...] = jnp.zeros_like(gram_ref)
        xsum_ref[...] = jnp.zeros_like(xsum_ref)

    x = x_ref[...]                                           # (Cin, tm), native dtype
    if hw % tm != 0:
        # Ragged tail: edge blocks read unspecified data in the OOB lanes;
        # zero them so they do not corrupt the sums / Gram.
        lane = lax.broadcasted_iota(jnp.int32, x.shape, 1)
        x = jnp.where(lane < (hw - i * tm), x, jnp.zeros_like(x))

    # Gram: contract both operands along the lane axis (X X^T) on the MXU,
    # accumulating in f32.
    gram_ref[...] += lax.dot_general(
        x, x, (((1,), (1,)), ((), ())), preferred_element_type=jnp.float32)
    # sum(x) as a matmul with a ones column so it also rides the MXU.
    ones = jnp.ones((x.shape[1], 1), x.dtype)
    xsum_ref[...] += jnp.dot(x, ones, preferred_element_type=jnp.float32)


# ---------------------------------------------------------------------------
# Pass 2: fused (scale-folded) conv + BN shift + leaky ReLU, fully parallel
# over (batch, M tiles).  OOB lanes of the edge tile only affect OOB output
# lanes (column-independent matmul) and are discarded on writeback.
# ---------------------------------------------------------------------------
def _apply_kernel(x_ref, w_ref, s_ref, o_ref):
    z = jnp.dot(w_ref[...], x_ref[...],
                preferred_element_type=jnp.float32)          # (Cout, tm) f32
    z = z + s_ref[...]                                       # + (Cout, 1) shift
    o_ref[...] = jnp.where(z >= 0, z, 0.1 * z).astype(o_ref.dtype)  # RReLU(0.1, 0.1)


def _choose_tm(hw, cin, cout, itemsize, block_m):
    """Lane-tile size: byte-derived lower target, VMEM-derived upper cap."""
    hw_pad = ((hw + 127) // 128) * 128
    tm = (_MIN_TILE_BYTES + cin * itemsize - 1) // (cin * itemsize)
    cap = _WORKING_SET_CAP // (2 * (cin + cout) * max(itemsize, 4))
    tm = min(tm, cap, hw_pad)
    if block_m is not None:
        tm = min(tm, int(block_m))
    return max(128, (tm // 128) * 128)


def basic_conv2d(x_nchw, conv_w, conv_b, bn_gamma, bn_beta, *, block_m=None):
    """x_nchw: (N, Cin, H, W); conv_w: (Cout, Cin, 1, 1).  Returns NCHW."""
    del conv_b  # bias before training-mode BatchNorm cancels exactly
    N, Cin, H, W = x_nchw.shape
    Cout = conv_w.shape[0]
    HW = H * W
    M = N * HW

    # Free view: merge the two contiguous trailing dims (no data movement).
    x3 = x_nchw.reshape(N, Cin, HW)
    itemsize = jnp.dtype(x3.dtype).itemsize

    tm = _choose_tm(HW, Cin, Cout, itemsize, block_m)
    n_tiles = -(-HW // tm)
    cparams = dict(vmem_limit_bytes=_VMEM_LIMIT_BYTES)

    # ---- pass 1: per-image partial sum(x) and X X^T -------------------------
    gram_n, xsum_n = pl.pallas_call(
        functools.partial(_stats_kernel, hw=HW, tm=tm),
        out_shape=(
            jax.ShapeDtypeStruct((N, Cin, Cin), jnp.float32),
            jax.ShapeDtypeStruct((N, Cin, 1), jnp.float32),
        ),
        grid=(N, n_tiles),
        in_specs=[pl.BlockSpec((None, Cin, tm), lambda n, i: (n, 0, i))],
        out_specs=[
            pl.BlockSpec((None, Cin, Cin), lambda n, i: (n, 0, 0)),
            pl.BlockSpec((None, Cin, 1), lambda n, i: (n, 0, 0)),
        ],
        compiler_params=pltpu.CompilerParams(
            dimension_semantics=("parallel", "arbitrary"), **cparams),
    )(x3)

    # ---- derive folded BN constants (tiny, plain JAX) -----------------------
    w2d = conv_w.reshape(Cout, Cin).astype(jnp.float32)
    gram = jnp.sum(gram_n, axis=0)                       # (Cin, Cin)
    sum_x = jnp.sum(xsum_n, axis=0).reshape(Cin)         # (Cin,)
    mean_x = sum_x / M
    cov_x = gram / M - jnp.outer(mean_x, mean_x)         # biased covariance of x
    mean_y = w2d @ mean_x                                # conv bias cancels under BN
    var_y = jnp.maximum(jnp.sum((w2d @ cov_x) * w2d, axis=1), 0.0)  # clamp: cancellation safety
    scale = bn_gamma.astype(jnp.float32) * lax.rsqrt(var_y + 1e-3)
    shift = bn_beta.astype(jnp.float32) - scale * mean_y
    w_fold = (scale[:, None] * w2d).astype(x3.dtype)     # (Cout, Cin), MXU-native dtype
    shift_col = shift.reshape(Cout, 1).astype(jnp.float32)

    # ---- pass 2: fused conv + BN + leaky ReLU, parallel over (N, M tiles) ---
    out3 = pl.pallas_call(
        _apply_kernel,
        out_shape=jax.ShapeDtypeStruct((N, Cout, HW), x3.dtype),
        grid=(N, n_tiles),
        in_specs=[
            pl.BlockSpec((None, Cin, tm), lambda n, i: (n, 0, i)),
            pl.BlockSpec((Cout, Cin), lambda n, i: (0, 0)),
            pl.BlockSpec((Cout, 1), lambda n, i: (0, 0)),
        ],
        out_specs=pl.BlockSpec((None, Cout, tm), lambda n, i: (n, 0, i)),
        compiler_params=pltpu.CompilerParams(
            dimension_semantics=("parallel", "parallel"), **cparams),
    )(x3, w_fold, shift_col)

    # Free view back to NCHW (split the trailing dim only).
    return out3.reshape(N, Cout, H, W)


def _reference(x_nchw, conv_w, conv_b, bn_gamma, bn_beta):
    """Pure-JAX reference (direct PyTorch-style formulation) for validation."""
    y = jnp.einsum("nchw,oc->nohw", x_nchw.astype(jnp.float32),
                   conv_w.reshape(conv_w.shape[0], -1).astype(jnp.float32))
    y = y + conv_b[None, :, None, None]
    mean = jnp.mean(y, axis=(0, 2, 3), keepdims=True)
    var = jnp.mean((y - mean) ** 2, axis=(0, 2, 3), keepdims=True)
    y = (y - mean) * lax.rsqrt(var + 0.001)
    y = y * bn_gamma[None, :, None, None] + bn_beta[None, :, None, None]
    return jnp.where(y >= 0, y, 0.1 * y)


if __name__ == "__main__":
    key = jax.random.PRNGKey(0)
    k_x, k_w, k_b, k_g, k_be = jax.random.split(key, 5)

    N, Cin, H, W = 2, 4, 16, 16
    Cout = 8

    x = jax.random.normal(k_x, (N, Cin, H, W), dtype=jnp.float32)
    conv_w = jax.random.normal(k_w, (Cout, Cin, 1, 1), dtype=jnp.float32) * 0.1
    conv_b = jax.random.normal(k_b, (Cout,), dtype=jnp.float32) * 0.1
    bn_gamma = 1.0 + 0.1 * jax.random.normal(k_g, (Cout,), dtype=jnp.float32)
    bn_beta = 0.1 * jax.random.normal(k_be, (Cout,), dtype=jnp.float32)

    # block_m=128 so the small test exercises a multi-tile grid.
    out = jax.block_until_ready(
        basic_conv2d(x, conv_w, conv_b, bn_gamma, bn_beta, block_m=128))
    ref = _reference(x, conv_w, conv_b, bn_gamma, bn_beta)
    assert out.shape == (N, Cout, H, W)
    assert jnp.allclose(out, ref, atol=5e-4, rtol=5e-4), (
        float(jnp.max(jnp.abs(out - ref))))

    # Ragged tail: H*W = 240 is not a multiple of the 128-lane tile, exercising
    # the iota mask in pass 1 and partial edge blocks in pass 2.
    x2 = jax.random.normal(k_x, (N, Cin, 16, 15), dtype=jnp.float32)
    out2 = jax.block_until_ready(
        basic_conv2d(x2, conv_w, conv_b, bn_gamma, bn_beta, block_m=128))
    ref2 = _reference(x2, conv_w, conv_b, bn_gamma, bn_beta)
    assert out2.shape == (N, Cout, 16, 15)
    assert jnp.allclose(out2, ref2, atol=5e-4, rtol=5e-4), (
        float(jnp.max(jnp.abs(out2 - ref2))))

    print("KERNEL_OK")
</pallas_src>

<mosaic_0001>
module attributes {stable_mosaic.version = 11 : i64} {
  func.func @_stats_kernel(%arg0: i32, %arg1: i32, %arg2: memref<1x4x128xf32, #tpu.memory_space<vmem>>, %arg3: memref<1x4x4xf32, #tpu.memory_space<vmem>>, %arg4: memref<1x4x1xf32, #tpu.memory_space<vmem>>) attributes {dimension_semantics = [#tpu.dimension_semantics<parallel>, #tpu.dimension_semantics<arbitrary>], iteration_bounds = array<i64: 2, 2>, scalar_prefetch = 0 : i64, scratch_operands = 0 : i64, tpu.core_type = #tpu.core_type<tc>, window_params = [{transform_indices = @transform_0, window_bounds = array<i64: 1, 4, 128>}, {transform_indices = @transform_1, window_bounds = array<i64: 1, 4, 4>}, {transform_indices = @transform_2, window_bounds = array<i64: 1, 4, 1>}]} {
    %c0_i32 = arith.constant 0 : i32
    %0 = arith.cmpi eq, %arg1, %c0_i32 : i32
    %1 = arith.extui %0 : i1 to i32
    %c0_i32_0 = arith.constant 0 : i32
    %2 = arith.cmpi ne, %1, %c0_i32_0 : i32
    scf.if %2 {
      %cst_17 = arith.constant 0.000000e+00 : f32
      %20 = vector.broadcast %cst_17 : f32 to vector<4x4xf32>
      %c0_18 = arith.constant 0 : index
      %c0_19 = arith.constant 0 : index
      %c0_20 = arith.constant 0 : index
      %21 = vector.load %arg3[%c0_18, %c0_19, %c0_20] : memref<1x4x4xf32, #tpu.memory_space<vmem>>, vector<1x4x4xf32>
      %22 = vector.shape_cast %21 : vector<1x4x4xf32> to vector<4x4xf32>
      %23 = vector.shape_cast %20 : vector<4x4xf32> to vector<1x4x4xf32>
      tpu.vector_store %arg3[%c0_18, %c0_19, %c0_20], %23 {strides = array<i32>} : memref<1x4x4xf32, #tpu.memory_space<vmem>>, vector<1x4x4xf32>,
      %cst_21 = arith.constant 0.000000e+00 : f32
      %24 = vector.broadcast %cst_21 : f32 to vector<4x1xf32>
      %c0_22 = arith.constant 0 : index
      %c0_23 = arith.constant 0 : index
      %c0_24 = arith.constant 0 : index
      %25 = vector.load %arg4[%c0_22, %c0_23, %c0_24] : memref<1x4x1xf32, #tpu.memory_space<vmem>>, vector<1x4x1xf32>
      %26 = vector.shape_cast %25 : vector<1x4x1xf32> to vector<4x1xf32>
      %27 = vector.shape_cast %24 : vector<4x1xf32> to vector<1x4x1xf32>
      tpu.vector_store %arg4[%c0_22, %c0_23, %c0_24], %27 {strides = array<i32>} : memref<1x4x1xf32, #tpu.memory_space<vmem>>, vector<1x4x1xf32>,
    } else {
    }
    %c0 = arith.constant 0 : index
    %c0_1 = arith.constant 0 : index
    %c0_2 = arith.constant 0 : index
    %3 = vector.load %arg2[%c0, %c0_1, %c0_2] : memref<1x4x128xf32, #tpu.memory_space<vmem>>, vector<1x4x128xf32>
    %4 = vector.shape_cast %3 : vector<1x4x128xf32> to vector<4x128xf32>
    %c0_3 = arith.constant 0 : index
    %c0_4 = arith.constant 0 : index
    %c0_5 = arith.constant 0 : index
    %5 = vector.load %arg3[%c0_3, %c0_4, %c0_5] : memref<1x4x4xf32, #tpu.memory_space<vmem>>, vector<1x4x4xf32>
    %6 = vector.shape_cast %5 : vector<1x4x4xf32> to vector<4x4xf32>
    %cst = arith.constant dense<0.000000e+00> : vector<4x4xf32>
    %7 = tpu.matmul %4, %4, %cst {dimension_numbers = #tpu.dot_dimension_numbers<[1], [1], [0], [0], [0, 0, 1, 0], [], []>} : vector<4x128xf32>, vector<4x128xf32>, vector<4x4xf32> -> vector<4x4xf32>
    %8 = arith.addf %6, %7 : vector<4x4xf32>
    %c0_6 = arith.constant 0 : index
    %c0_7 = arith.constant 0 : index
    %c0_8 = arith.constant 0 : index
    %9 = vector.load %arg3[%c0_6, %c0_7, %c0_8] : memref<1x4x4xf32, #tpu.memory_space<vmem>>, vector<1x4x4xf32>
    %10 = vector.shape_cast %9 : vector<1x4x4xf32> to vector<4x4xf32>
    %11 = vector.shape_cast %8 : vector<4x4xf32> to vector<1x4x4xf32>
    tpu.vector_store %arg3[%c0_6, %c0_7, %c0_8], %11 {strides = array<i32>} : memref<1x4x4xf32, #tpu.memory_space<vmem>>, vector<1x4x4xf32>,
    %cst_9 = arith.constant 1.000000e+00 : f32
    %12 = vector.broadcast %cst_9 : f32 to vector<128x1xf32>
    %c0_10 = arith.constant 0 : index
    %c0_11 = arith.constant 0 : index
    %c0_12 = arith.constant 0 : index
    %13 = vector.load %arg4[%c0_10, %c0_11, %c0_12] : memref<1x4x1xf32, #tpu.memory_space<vmem>>, vector<1x4x1xf32>
    %14 = vector.shape_cast %13 : vector<1x4x1xf32> to vector<4x1xf32>
    %cst_13 = arith.constant dense<0.000000e+00> : vector<4x1xf32>
    %15 = tpu.matmul %4, %12, %cst_13 {dimension_numbers = #tpu.dot_dimension_numbers<[1], [0], [0], [1], [0, 0, 1, 1], [], []>} : vector<4x128xf32>, vector<128x1xf32>, vector<4x1xf32> -> vector<4x1xf32>
    %16 = arith.addf %14, %15 : vector<4x1xf32>
    %c0_14 = arith.constant 0 : index
    %c0_15 = arith.constant 0 : index
    %c0_16 = arith.constant 0 : index
    %17 = vector.load %arg4[%c0_14, %c0_15, %c0_16] : memref<1x4x1xf32, #tpu.memory_space<vmem>>, vector<1x4x1xf32>
    %18 = vector.shape_cast %17 : vector<1x4x1xf32> to vector<4x1xf32>
    %19 = vector.shape_cast %16 : vector<4x1xf32> to vector<1x4x1xf32>
    tpu.vector_store %arg4[%c0_14, %c0_15, %c0_16], %19 {strides = array<i32>} : memref<1x4x1xf32, #tpu.memory_space<vmem>>, vector<1x4x1xf32>,
    return
  }
  func.func @transform_0(%arg0: i32, %arg1: i32) -> (i32, i32, i32) {
    %c0_i32 = arith.constant 0 : i32
    %c0_i32_0 = arith.constant 0 : i32
    return %arg0, %c0_i32, %arg1 : i32, i32, i32
  }
  func.func @transform_1(%arg0: i32, %arg1: i32) -> (i32, i32, i32) {
    %c0_i32 = arith.constant 0 : i32
    %c0_i32_0 = arith.constant 0 : i32
    %c0_i32_1 = arith.constant 0 : i32
    return %arg0, %c0_i32, %c0_i32_0 : i32, i32, i32
  }
  func.func @transform_2(%arg0: i32, %arg1: i32) -> (i32, i32, i32) {
    %c0_i32 = arith.constant 0 : i32
    %c0_i32_0 = arith.constant 0 : i32
    %c0_i32_1 = arith.constant 0 : i32
    return %arg0, %c0_i32, %c0_i32_0 : i32, i32, i32
  }
}

</mosaic_0001>

<llo_original>
// kernel: tpu_custom_call.1
$region0: #{tpu_custom_call.1}
  #allocation0 [shape = 'u32[]', space=smem, size = 0x4, offset = 0x4, fixed_abs, tag = 'smem constant byte address 0x4 - core index']
  #allocation1 [shape = 'u32[72,128]{1,0:T(1,128)}', space=vmem, size = 0x9000, scoped, tag = 'internal scratch']
  %s0 = inlined_call_operand.hbm [shape: f32[2,4,256], index: 0, kind: input, shape index: {}]
  %s1 = inlined_call_operand.hbm [shape: f32[2,4,4], index: 1, kind: output, shape index: {0}]
  %s2 = inlined_call_operand.vmem [shape: f32[2,4,1], index: 2, kind: output, shape index: {1}]
  %3 = xla_tuple %s1, %s2
  %s4 = sld [smem:[#allocation0]]
  $region53: #{tpu_custom_call.1} parent=0
    _
  %s6 = ssub.s32 1, %s4
  %s7 = scalar_select 0, %s6, %s4
  $region1: #{tpu_custom_call.1} parent=0
    #allocation2 [shape = 'u8[4096]{0}', space=vmem, size = 0x1000, scoped, tag = 'input window, operand 0']
    #allocation3 [shape = 's32[2]{0}', space=sflag, size = 0x8, scoped, tag = 'scoped memory for tpu_custom_call.1']
    #allocation4 [shape = 's32[2]{0}', space=sflag, size = 0x8, scoped, tag = 'scoped memory for tpu_custom_call.1']
    #allocation5 [shape = 'u8[4096]{0}', space=vmem, size = 0x1000, scoped, tag = 'output window, operand 0']
    %8 = vsyncpa [#allocation3], 0
    %s9 = scalar_lea.sflag [#allocation3], 1
    %10 = vsyncpa %s9, 0
    %11 = vsyncpa [#allocation4], 0
    %s12 = scalar_lea.sflag [#allocation4], 1
    %13 = vsyncpa %s12, 0
    loop: start=0, step=1, limit=6
    $region2: #{tpu_custom_call.1} parent=1 // loop_pre_header
      _
    $region3: #{tpu_custom_call.1} parent=1 // loop_header
      %s15 = sphi 0, %s19
      %p16 = scmp.ge.s32.totalorder %s15, 6
      %s22 = sphi 0, %s34
      %s23 = sphi 0, %s30
      %s24 = sphi 0, %s22
      %s25 = sphi 0, %s23
      %s26 = sphi 0, %s24
      %s27 = sphi 0, %s25
      %s39 = sphi 0, %s41
      %s42 = sphi 0, %s39
      %s43 = sphi 0, %s42
      %s59 = sphi 0, %s43
      %s65 = sphi 0, %s67
      %s68 = sphi 0, %s65
      %s69 = sphi 0, %s68
      %s85 = sphi 0, %s69
      %s91 = sphi 0, %s93
      %s94 = sphi 0, %s91
      %s95 = sphi 0, %s94
      %s111 = sphi 0, %s95
    $region4: #{tpu_custom_call.1} parent=1 // loop_header_branch
      %18 = sbr.rel (%p16) target = $region8
    $region5: #{tpu_custom_call.1} parent=1 // loop_body
      %s20 = ssub.s32 %s15, 1
      %s21 = ssub.s32 %s15, 2
      %s28 = sadd.s32 1, %s23
      %p29 = scmp.ge.s32.totalorder %s28, 2
      %s30 = scalar_select %p29, 0, %s28
      %s31 = sadd.s32 1, %s22
      %s32 = scalar_select %p29, %s31, %s22
      %p33 = scmp.ge.s32.totalorder %s32, 2
      %s34 = scalar_select %p33, 0, %s32
      %s35 = ssub.s32 %s22, %s34
      %s36 = ssub.s32 %s23, %s30
      %s37 = sor.u32 %s35, %s36
      %p38 = scmp.eq.s32.totalorder %s37, 0
      %s40 = sadd.s32 %s39, 1
      %s41 = scalar_select %p38, %s39, %s40
      %p44 = pneg %p38
      %p45 = scmp.eq.s32.totalorder %s15, 3
      %p46 = por %p44, %p45
      %p47 = scmp.ne.s32.totalorder %s39, %s42
      %p48 = scmp.eq.s32.totalorder %s15, 0
      %p49 = por %p47, %p48
      %p50 = scmp.ne.s32.totalorder %s39, %s42
      %p51 = scmp.eq.s32.totalorder %s20, 3
      %p52 = por %p50, %p51
      %p53 = scmp.ne.s32.totalorder %s42, %s43
      %p54 = scmp.eq.s32.totalorder %s20, 0
      %p55 = por %p53, %p54
      %p56 = scmp.ne.s32.totalorder %s42, %s43
      %p57 = scmp.eq.s32.totalorder %s21, 3
      %p58 = por %p56, %p57
      %p60 = scmp.ne.s32.totalorder %s43, %s59
      %p61 = scmp.eq.s32.totalorder %s21, 0
      %p62 = por %p60, %p61
      %s63 = ssub.s32 %s22, %s34
      %p64 = scmp.eq.s32.totalorder %s63, 0
      %s66 = sadd.s32 %s65, 1
      %s67 = scalar_select %p64, %s65, %s66
      %p70 = pneg %p64
      %p71 = scmp.eq.s32.totalorder %s15, 3
      %p72 = por %p70, %p71
      %p73 = scmp.ne.s32.totalorder %s65, %s68
      %p74 = scmp.eq.s32.totalorder %s15, 0
      %p75 = por %p73, %p74
      %p76 = scmp.ne.s32.totalorder %s65, %s68
      %p77 = scmp.eq.s32.totalorder %s20, 3
      %p78 = por %p76, %p77
      %p79 = scmp.ne.s32.totalorder %s68, %s69
      %p80 = scmp.eq.s32.totalorder %s20, 0
      %p81 = por %p79, %p80
      %p82 = scmp.ne.s32.totalorder %s68, %s69
      %p83 = scmp.eq.s32.totalorder %s21, 3
      %p84 = por %p82, %p83
      %p86 = scmp.ne.s32.totalorder %s69, %s85
      %p87 = scmp.eq.s32.totalorder %s21, 0
      %p88 = por %p86, %p87
      %s89 = ssub.s32 %s22, %s34
      %p90 = scmp.eq.s32.totalorder %s89, 0
      %s92 = sadd.s32 %s91, 1
      %s93 = scalar_select %p90, %s91, %s92
      %p96 = pneg %p90
      %p97 = scmp.eq.s32.totalorder %s15, 3
      %p98 = por %p96, %p97
      %p99 = scmp.ne.s32.totalorder %s91, %s94
      %p100 = scmp.eq.s32.totalorder %s15, 0
      %p101 = por %p99, %p100
      %p102 = scmp.ne.s32.totalorder %s91, %s94
      %p103 = scmp.eq.s32.totalorder %s20, 3
      %p104 = por %p102, %p103
      %p105 = scmp.ne.s32.totalorder %s94, %s95
      %p106 = scmp.eq.s32.totalorder %s20, 0
      %p107 = por %p105, %p106
      %p108 = scmp.ne.s32.totalorder %s94, %s95
      %p109 = scmp.eq.s32.totalorder %s21, 3
      %p110 = por %p108, %p109
      %p112 = scmp.ne.s32.totalorder %s95, %s111
      %p113 = scmp.eq.s32.totalorder %s21, 0
      %p114 = por %p112, %p113
      %p115 = scmp.le.s32.totalorder 1, %s15
      %p116 = scmp.lt.s32.totalorder %s15, 5
      %p117 = pnand %p115, %p116
      %p118 = pneg %p117
      // Predicated region
      $region9: #{tpu_custom_call.1} parent=5 // pred_check
        _
      $region10: #{tpu_custom_call.1} parent=5 // pred_check_branch
        %120 = sbr.rel (%p117) target = $region12
      $region11: #{tpu_custom_call.1} parent=5 // pred_region
        %s121 = ssub.s32 %s15, 1
      $region12: #{tpu_custom_call.1} parent=5 // pred_fallthru
        _
      %p122 = scmp.lt.s32.totalorder %s15, 4
      // Predicated region
      $region13: #{tpu_custom_call.1} parent=5 // pred_check
        %p123 = pneg %p122
      $region14: #{tpu_custom_call.1} parent=5 // pred_check_branch
        %125 = sbr.rel (%p123) target = $region16
      $region15: #{tpu_custom_call.1} parent=5 // pred_region
        // Predicated region
        $region17: #{tpu_custom_call.1} parent=15 // pred_check
          %p126 = pneg %p49
        $region18: #{tpu_custom_call.1} parent=15 // pred_check_branch
          %128 = sbr.rel (%p126) target = $region20
        $region19: #{tpu_custom_call.1} parent=15 // pred_region
          %s129 = sand.u32 %s39, 1
          %s130 = scalar_lea.sflag [#allocation3], %s129
          %s131 = sand.u32 %s39, 1
          %s132 = smul.addr %s131, 4
          %s133 = scalar_lea.vmem [#allocation2], %s132
          %135 = vsyncadd %s130, 0
          %s136 = smul.addr %s22, 2
          %s137 = sadd.s32 %s23, %s136
          %s138 = smul.addr %s137, 4
          %s139 = scalar_lea.hbm %s0, %s138
          %s141 = sshll.u32 %s139, 4
          %s142 = int_to_ptr.hbm [resolvable:$true] %s141
          %s143 = sshll.u32 %s133, 4
          %s144 = int_to_ptr.vmem [resolvable:$true] %s143
          %146 = dma.hbm_to_vmem [thread:$0]  %s142, 64, %s144, %s130
        $region20: #{tpu_custom_call.1} parent=15 // pred_fallthru
          _
      $region16: #{tpu_custom_call.1} parent=5 // pred_fallthru
        _
      %p147 = scmp.le.s32.totalorder 1, %s15
      %p148 = scmp.lt.s32.totalorder %s15, 5
      %p149 = pnand %p147, %p148
      %p150 = pneg %p149
      // Predicated region
      $region21: #{tpu_custom_call.1} parent=5 // pred_check
        _
      $region22: #{tpu_custom_call.1} parent=5 // pred_check_branch
        %152 = sbr.rel (%p149) target = $region24
      $region23: #{tpu_custom_call.1} parent=5 // pred_region
        %s153 = ssub.s32 %s15, 1
        %s154 = sand.u32 %s42, 1
        %s155 = scalar_lea.sflag [#allocation3], %s154
        %s156 = sand.u32 %s42, 1
        %s157 = smul.addr %s156, 4
        %s158 = scalar_lea.vmem [#allocation2], %s157
        // Predicated region
        $region25: #{tpu_custom_call.1} parent=23 // pred_check
          %p159 = pneg %p55
        $region26: #{tpu_custom_call.1} parent=23 // pred_check_branch
          %161 = sbr.rel (%p159) target = $region28
        $region27: #{tpu_custom_call.1} parent=23 // pred_region
          %163 = dma.done %s155, 64
        $region28: #{tpu_custom_call.1} parent=23 // pred_fallthru
          _
        %s164 = sand.u32 %s42, 1
        %s165 = scalar_lea.sflag [#allocation3], %s164
        %s166 = sand.u32 %s42, 1
        %s167 = smul.addr %s166, 4
        %s168 = scalar_lea.vmem [#allocation2], %s167
        %p169 = pneg %p55
        %p170 = pneg %p52
        %p171 = pneg %p81
        %p172 = pneg %p78
        %s173 = sand.u32 %s68, 1
        %s174 = scalar_lea.sflag [#allocation4], %s173
        %s175 = sand.u32 %s68, 1
        %s176 = smul.addr %s175, 4
        %s177 = scalar_lea.vmem [#allocation5], %s176
        %p178 = pneg %p107
        %p179 = pneg %p104
        %p180 = scmp.lt.s32.totalorder %s24, 1
        %s181 = scalar_select %p180, %s24, 1
        %s182 = smul.addr %s181, 4
        %s183 = scalar_lea.vmem %s2, %s182
        %p184 = scmp.lt.s32.totalorder %s24, 1
        %s185 = scalar_select %p184, %s24, 1
        %s186 = smul.addr %s185, 4
        %s187 = scalar_lea.vmem %s2, %s186
        %p188 = scmp.eq.s32.totalorder %s25, 0
        // Predicated region
        $region29: #{tpu_custom_call.1} parent=23 // pred_check
          %p189 = pneg %p188
        $region30: #{tpu_custom_call.1} parent=23 // pred_check_branch
          %191 = sbr.rel (%p189) target = $region32
        $region31: #{tpu_custom_call.1} parent=23 // pred_region
          %vm192 = vcmask 27648
          %193 = vst.msk [vmem:[%s177] sm:$0xf] %vm192, 0.0
          %vm194 = vcmask 3072
          %195 = vst.msk [vmem:[%s187] sm:$0xf] %vm194, 0.0
        $region32: #{tpu_custom_call.1} parent=23 // pred_fallthru
          _
        %v196 = vld [vmem:[%s158] sm:$0xf]
        %v197 = vld [vmem:[%s177] sm:$0xf]
        %198 = vmatpush.xpose.msra.mxu0 0.0
        %199 = vmatpush.xpose.msra.mxu0 0.0
        %200 = vmatpush.xpose.msra.mxu0 0.0
        %201 = vmatpush.xpose.msra.mxu0 0.0
        %202 = vmatpush.xpose.msra.mxu0 0.0
        %203 = vmatpush.xpose.msra.mxu0 0.0
        %204 = vmatpush.xpose.msra.mxu0 0.0
        %205 = vmatpush.xpose.msra.mxu0 0.0
        %206 = vmatpush.xpose.msra.mxu0 0.0
        %207 = vmatpush.xpose.msra.mxu0 0.0
        %208 = vmatpush.xpose.msra.mxu0 0.0
        %209 = vmatpush.xpose.msra.mxu0 0.0
        %210 = vmatpush.xpose.msra.mxu0 0.0
        %211 = vmatpush.xpose.msra.mxu0 0.0
        %212 = vmatpush.xpose.msra.mxu0 0.0
        %213 = vmatpush.xpose.msra.mxu0 %v196
        %214 = vmatmul.f32.gmra.mxu0 %v196
        %v215 = vpop.f32.mrf.mxu0
        %v216 = vadd.f32 0.0, %v215
        %217 = vdwg.mxu0
        %v218 = vadd.f32 %v197, %v216
        %vm219 = vcmask 27648
        %220 = vst.msk [vmem:[%s177] sm:$0xf] %vm219, %v218
        %v221 = vld [vmem:[%s187] sm:$0xf]
        %222 = vmatpush.msra.mxu0 1.0
        %223 = vmatpush.msra.mxu0 1.0
        %224 = vmatpush.msra.mxu0 1.0
        %225 = vmatpush.msra.mxu0 1.0
        %226 = vmatpush.msra.mxu0 1.0
        %227 = vmatpush.msra.mxu0 1.0
        %228 = vmatpush.msra.mxu0 1.0
        %229 = vmatpush.msra.mxu0 1.0
        %230 = vmatpush.msra.mxu0 1.0
        %231 = vmatpush.msra.mxu0 1.0
        %232 = vmatpush.msra.mxu0 1.0
        %233 = vmatpush.msra.mxu0 1.0
        %234 = vmatpush.msra.mxu0 1.0
        %235 = vmatpush.msra.mxu0 1.0
        %236 = vmatpush.msra.mxu0 1.0
        %237 = vmatpush.msra.mxu0 1.0
        %238 = vmatmul.f32.gmra.mxu0 %v196
        %v239 = vpop.f32.mrf.mxu0
        %v240 = vadd.f32 0.0, %v239
        %241 = vdwg.mxu0
        %v242 = vadd.f32 %v221, %v240
        %vm243 = vcmask 3072
        %244 = vst.msk [vmem:[%s187] sm:$0xf] %vm243, %v242
        %s245 = sand.u32 %s68, 1
        %s246 = scalar_lea.sflag [#allocation4], %s245
        %s247 = sand.u32 %s68, 1
        %s248 = smul.addr %s247, 4
        %s249 = scalar_lea.vmem [#allocation5], %s248
        %p250 = scmp.lt.s32.totalorder %s24, 1
        %s251 = scalar_select %p250, %s24, 1
        %s252 = smul.addr %s251, 4
        %s253 = scalar_lea.vmem %s2, %s252
        // Predicated region
        $region33: #{tpu_custom_call.1} parent=23 // pred_check
          %p254 = pneg %p78
        $region34: #{tpu_custom_call.1} parent=23 // pred_check_branch
          %256 = sbr.rel (%p254) target = $region36
        $region35: #{tpu_custom_call.1} parent=23 // pred_region
          %258 = vsyncadd %s246, 0
          %s259 = smul.addr %s24, 4
          %s260 = scalar_lea.hbm %s1, %s259
          %s262 = sshll.u32 %s249, 4
          %s263 = int_to_ptr.vmem [resolvable:$true] %s262
          %s264 = sshll.u32 %s260, 4
          %s265 = int_to_ptr.hbm [resolvable:$true] %s264
          %267 = dma.vmem_to_hbm [thread:$0]  %s263, 64, %s265, %s246
        $region36: #{tpu_custom_call.1} parent=23 // pred_fallthru
          _
        // Predicated region
        $region37: #{tpu_custom_call.1} parent=23 // pred_check
          %p268 = pneg %p104
        $region38: #{tpu_custom_call.1} parent=23 // pred_check_branch
          %270 = sbr.rel (%p268) target = $region40
        $region39: #{tpu_custom_call.1} parent=23 // pred_region
          _
        $region40: #{tpu_custom_call.1} parent=23 // pred_fallthru
          _
      $region24: #{tpu_custom_call.1} parent=5 // pred_fallthru
        _
      %p271 = scmp.le.s32.totalorder 2, %s15
      // Predicated region
      $region41: #{tpu_custom_call.1} parent=5 // pred_check
        %p272 = pneg %p271
      $region42: #{tpu_custom_call.1} parent=5 // pred_check_branch
        %274 = sbr.rel (%p272) target = $region44
      $region43: #{tpu_custom_call.1} parent=5 // pred_region
        %s275 = ssub.s32 %s15, 2
        // Predicated region
        $region45: #{tpu_custom_call.1} parent=43 // pred_check
          %p276 = pneg %p84
        $region46: #{tpu_custom_call.1} parent=43 // pred_check_branch
          %278 = sbr.rel (%p276) target = $region48
        $region47: #{tpu_custom_call.1} parent=43 // pred_region
          %s279 = sand.u32 %s69, 1
          %s280 = scalar_lea.sflag [#allocation4], %s279
          %s281 = sand.u32 %s69, 1
          %s282 = smul.addr %s281, 4
          %s283 = scalar_lea.vmem [#allocation5], %s282
          %285 = dma.done %s280, 64
        $region48: #{tpu_custom_call.1} parent=43 // pred_fallthru
          _
        // Predicated region
        $region49: #{tpu_custom_call.1} parent=43 // pred_check
          %p286 = pneg %p110
        $region50: #{tpu_custom_call.1} parent=43 // pred_check_branch
          %288 = sbr.rel (%p286) target = $region52
        $region51: #{tpu_custom_call.1} parent=43 // pred_region
          %p289 = scmp.lt.s32.totalorder %s26, 1
          %s290 = scalar_select %p289, %s26, 1
          %s291 = smul.addr %s290, 4
          %s292 = scalar_lea.vmem %s2, %s291
        $region52: #{tpu_custom_call.1} parent=43 // pred_fallthru
          _
      $region44: #{tpu_custom_call.1} parent=5 // pred_fallthru
        _
    $region6: #{tpu_custom_call.1} parent=1 // loop_footer
      %s19 = sadd.s32 1, %s15
    $region7: #{tpu_custom_call.1} parent=1 // loop_footer_branch
      %14 = sbr.rel target = $region3
    $region8: #{tpu_custom_call.1} parent=1 // loop_exit
      _
    %293 = vsyncpa [#allocation3], 1
    %s294 = scalar_lea.sflag [#allocation3], 1
    %295 = vsyncpa %s294, 1
    %296 = vsyncpa [#allocation4], 1
    %s297 = scalar_lea.sflag [#allocation4], 1
    %298 = vsyncpa %s297, 1

</llo_original>
